<compile_context>
chip_gen: v6e
topology: v6e:2x2x1
jax: 0.10.0
libtpu: 0.0.40
codegen_flags: <defaults>
</compile_context>

<pallas_src>
import functools

import numpy as np
import jax
import jax.numpy as jnp
from jax.experimental import pallas as pl
from jax.experimental.pallas import tpu as pltpu


# ----------------------------------------------------------------------------
# Parameter construction (deterministic, no librosa / no file IO)
# ----------------------------------------------------------------------------
def fft_frequencies(sr: float, n_fft: int) -> np.ndarray:
    # librosa.fft_frequencies
    return np.linspace(0.0, sr / 2.0, 1 + n_fft // 2, dtype=np.float64)


def a_weighting_db(frequencies: np.ndarray, min_db: float = -80.0) -> np.ndarray:
    # librosa.A_weighting
    f_sq = np.asanyarray(frequencies, dtype=np.float64) ** 2.0
    const = np.array([12200.0, 20.6, 107.7, 737.9], dtype=np.float64) ** 2.0
    weights = 2.0 + 20.0 * (
        np.log10(const[0])
        + 2.0 * np.log10(f_sq)
        - np.log10(f_sq + const[0])
        - np.log10(f_sq + const[1])
        - 0.5 * np.log10(f_sq + const[2])
        - 0.5 * np.log10(f_sq + const[3])
    )
    return np.maximum(min_db, weights)


# ----------------------------------------------------------------------------
# Pallas kernel
# ----------------------------------------------------------------------------
def _loudness_kernel(spec_ref, aw_ref, out_ref, *, min_db, inv_f, n_freq):
    # spec_ref: (tR, F)  block of the flattened (B*T, F) power spectrogram
    # aw_ref:   (F, 1)   A-weighting column with the -20.7 offset folded in
    # out_ref:  (1, tR)  lane-dense per-frame loudness
    x = spec_ref[...]                                              # (tR, F)

    # Transpose the tile onto the lane-dense (F, tR) layout using the otherwise
    # idle MXU (identity matrix, q.k^T-style contraction over the minor axes).
    # This keeps the transcendental chain at full lane utilisation and makes
    # the frequency mean a cheap sublane reduction with a lane-dense result.
    eye = (
        jax.lax.broadcasted_iota(jnp.int32, (n_freq, n_freq), 0)
        == jax.lax.broadcasted_iota(jnp.int32, (n_freq, n_freq), 1)
    ).astype(jnp.float32)
    xt = jax.lax.dot_general(
        eye, x,
        dimension_numbers=(((1,), (1,)), ((), ())),
        preferred_element_type=jnp.float32,
    )                                                               # (F, tR)
    # Numerical hygiene for the MXU round-trip (power spectrogram is >= 0).
    xt = jnp.maximum(xt, 0.0)

    power_db = jnp.log10(jnp.sqrt(xt) + 1e-10)                      # spec**0.5 == sqrt
    loud = jnp.maximum(power_db + aw_ref[...], -min_db)             # + A-weighting - 20.7, clamp
    # Mean over the true F rows (padded sublanes are masked by Mosaic).
    out_ref[...] = jnp.sum(loud, axis=0, keepdims=True) * inv_f     # (1, tR)


def loudness_pallas(spec: jax.Array, a_weighting: jax.Array, min_db: float,
                    *, max_tile_rows: int = 8192) -> jax.Array:
    """spec: (B, T, F) float32, a_weighting: (F,) float32 -> (B, T) float32."""
    B, T, F = spec.shape
    BT = B * T

    # Free reshapes only: no transpose, no pad, no extra HBM passes.
    spec2d = spec.astype(jnp.float32).reshape(BT, F)
    aw_col = (a_weighting.astype(jnp.float32) - 20.7).reshape(F, 1)

    # Large row tiles (frames) per grid step, capped at ceil(BT/2) so the grid
    # keeps >= 2 steps (feeds both TensorCores on v7x) whenever possible.
    if BT <= 128:
        t_rows = BT
    else:
        half = ((-(-BT // 2)) + 127) // 128 * 128
        t_rows = max(128, min(max_tile_rows, half))
    grid = (pl.cdiv(BT, t_rows),)

    out2d = pl.pallas_call(
        functools.partial(
            _loudness_kernel,
            min_db=float(min_db),
            inv_f=1.0 / float(F),
            n_freq=F,
        ),
        out_shape=jax.ShapeDtypeStruct((1, BT), jnp.float32),
        grid_spec=pltpu.PrefetchScalarGridSpec(
            num_scalar_prefetch=0,
            grid=grid,
            in_specs=[
                pl.BlockSpec((t_rows, F), lambda r: (r, 0)),   # spec rows (ragged last tile OK)
                pl.BlockSpec((F, 1), lambda r: (0, 0)),        # shared A-weighting column
            ],
            out_specs=pl.BlockSpec((1, t_rows), lambda r: (0, r)),
        ),
        compiler_params=pltpu.CompilerParams(
            dimension_semantics=("parallel",),
            vmem_limit_bytes=32 * 1024 * 1024,
            internal_scratch_in_bytes=4 * 1024 * 1024,
        ),
    )(spec2d, aw_col)

    return out2d.reshape(B, T)


# ----------------------------------------------------------------------------
# Pure-JAX reference for a quick self-check
# ----------------------------------------------------------------------------
def loudness_ref(spec, a_weighting, min_db):
    power_db = jnp.log10(spec ** 0.5 + 1e-10)
    loud = power_db + a_weighting
    loud = loud - 20.7
    loud = jnp.maximum(loud, -min_db)
    return jnp.mean(loud, axis=-1).astype(jnp.float32)


if __name__ == "__main__":
    sr = 16000
    n_fft = 64                      # -> F = n_fft // 2 + 1 = 33 frequency bins
    min_db = 80.0
    B, T = 2, 250                   # T chosen so the last tile is ragged (no-pad path)
    F = n_fft // 2 + 1

    # Deterministic "parameter" (the non-trainable a_weighting buffer)
    freqs = fft_frequencies(sr, n_fft)
    aw_np = a_weighting_db(freqs + 1e-10)
    a_weighting = jnp.asarray(aw_np, dtype=jnp.float32)   # (F,)

    # Deterministic input power spectrogram (non-negative)
    key = jax.random.PRNGKey(0)
    spec = jax.random.uniform(key, (B, T, F), dtype=jnp.float32, minval=0.0, maxval=4.0)

    out = jax.block_until_ready(loudness_pallas(spec, a_weighting, min_db))

    ref = loudness_ref(spec, a_weighting, min_db)
    np.testing.assert_allclose(np.asarray(out), np.asarray(ref), rtol=1e-5, atol=2e-5)

    print("KERNEL_OK")
</pallas_src>

<mosaic_0001>
module attributes {stable_mosaic.version = 11 : i64} {
  func.func @_loudness_kernel(%arg0: i32, %arg1: memref<256x33xf32, #tpu.memory_space<vmem>>, %arg2: memref<33x1xf32, #tpu.memory_space<vmem>>, %arg3: memref<1x256xf32, #tpu.memory_space<vmem>>) attributes {dimension_semantics = [#tpu.dimension_semantics<parallel>], iteration_bounds = array<i64: 2>, scalar_prefetch = 0 : i64, scratch_operands = 0 : i64, tpu.core_type = #tpu.core_type<tc>, window_params = [{transform_indices = @transform_0, window_bounds = array<i64: 256, 33>}, {pipeline_mode = #tpu.pipeline_mode<synchronous>, transform_indices = @transform_1, window_bounds = array<i64: 33, 1>}, {transform_indices = @transform_2, window_bounds = array<i64: 1, 256>}]} {
    %c0 = arith.constant 0 : index
    %c0_0 = arith.constant 0 : index
    %0 = vector.load %arg1[%c0, %c0_0] : memref<256x33xf32, #tpu.memory_space<vmem>>, vector<256x33xf32>
    %1 = tpu.iota {dimensions = array<i32: 0>} : vector<33x33xi32>
    %2 = tpu.iota {dimensions = array<i32: 1>} : vector<33x33xi32>
    %3 = arith.cmpi eq, %1, %2 : vector<33x33xi32>
    %4 = arith.extui %3 : vector<33x33xi1> to vector<33x33xi32>
    %5 = arith.sitofp %4 : vector<33x33xi32> to vector<33x33xf32>
    %cst = arith.constant dense<0.000000e+00> : vector<33x256xf32>
    %6 = tpu.matmul %5, %0, %cst {dimension_numbers = #tpu.dot_dimension_numbers<[1], [1], [0], [0], [0, 0, 1, 0], [], []>} : vector<33x33xf32>, vector<256x33xf32>, vector<33x256xf32> -> vector<33x256xf32>
    %cst_1 = arith.constant 0.000000e+00 : f32
    %7 = vector.broadcast %cst_1 : f32 to vector<33x256xf32>
    %8 = arith.maximumf %6, %7 : vector<33x256xf32>
    %9 = math.sqrt %8 : vector<33x256xf32>
    %cst_2 = arith.constant 1.000000e-10 : f32
    %10 = vector.broadcast %cst_2 : f32 to vector<33x256xf32>
    %11 = arith.addf %9, %10 : vector<33x256xf32>
    %12 = math.log %11 : vector<33x256xf32>
    %cst_3 = arith.constant 0.434294492 : f32
    %13 = vector.broadcast %cst_3 : f32 to vector<33x256xf32>
    %14 = arith.mulf %12, %13 : vector<33x256xf32>
    %c0_4 = arith.constant 0 : index
    %c0_5 = arith.constant 0 : index
    %15 = vector.load %arg2[%c0_4, %c0_5] : memref<33x1xf32, #tpu.memory_space<vmem>>, vector<33x1xf32>
    %16 = vector.broadcast %15 : vector<33x1xf32> to vector<33x256xf32>
    %17 = arith.addf %14, %16 : vector<33x256xf32>
    %cst_6 = arith.constant -8.000000e+01 : f32
    %18 = vector.broadcast %cst_6 : f32 to vector<33x256xf32>
    %19 = arith.maximumf %17, %18 : vector<33x256xf32>
    %cst_7 = arith.constant dense<0.000000e+00> : vector<256xf32>
    %20 = vector.multi_reduction <add>, %19, %cst_7 [0] : vector<33x256xf32> to vector<256xf32>
    %21 = vector.shape_cast %20 : vector<256xf32> to vector<1x256xf32>
    %cst_8 = arith.constant 0.0303030312 : f32
    %22 = vector.broadcast %cst_8 : f32 to vector<1x256xf32>
    %23 = arith.mulf %21, %22 : vector<1x256xf32>
    %c0_9 = arith.constant 0 : index
    %c0_10 = arith.constant 0 : index
    %24 = vector.load %arg3[%c0_9, %c0_10] : memref<1x256xf32, #tpu.memory_space<vmem>>, vector<1x256xf32>
    tpu.vector_store %arg3[%c0_9, %c0_10], %23 {strides = array<i32>} : memref<1x256xf32, #tpu.memory_space<vmem>>, vector<1x256xf32>,
    return
  }
  func.func @transform_0(%arg0: i32) -> (i32, i32) {
    %c0_i32 = arith.constant 0 : i32
    %c0_i32_0 = arith.constant 0 : i32
    return %arg0, %c0_i32 : i32, i32
  }
  func.func @transform_1(%arg0: i32) -> (i32, i32) {
    %c0_i32 = arith.constant 0 : i32
    %c0_i32_0 = arith.constant 0 : i32
    %c0_i32_1 = arith.constant 0 : i32
    return %c0_i32, %c0_i32_0 : i32, i32
  }
  func.func @transform_2(%arg0: i32) -> (i32, i32) {
    %c0_i32 = arith.constant 0 : i32
    %c0_i32_0 = arith.constant 0 : i32
    return %c0_i32, %arg0 : i32, i32
  }
}

</mosaic_0001>

<llo_original>
// kernel: tpu_custom_call.1
$region0: #{tpu_custom_call.1}
  #allocation0 [shape = 'u32[]', space=smem, size = 0x4, offset = 0x4, fixed_abs, tag = 'smem constant byte address 0x4 - core index']
  #allocation1 [shape = 'u32[8192,128]{1,0:T(1,128)}', space=vmem, size = 0x400000, scoped, tag = 'internal scratch']
  %s0 = inlined_call_operand.vmem [shape: f32[500,33], index: 0, kind: input, shape index: {}]
  %s1 = inlined_call_operand.vmem [shape: f32[33,1], index: 1, kind: input, shape index: {}]
  %s2 = inlined_call_operand.hbm [shape: f32[1,500], index: 2, kind: output, shape index: {}]
  %s3 = sld [smem:[#allocation0]]
  $region41: #{tpu_custom_call.1} parent=0
    _
  %s5 = ssub.s32 1, %s3
  %s6 = scalar_select 0, %s5, %s3
  $region1: #{tpu_custom_call.1} parent=0
    #allocation2 [shape = 'u8[2048]{0}', space=vmem, size = 0x800, scoped, tag = 'output window, operand 0']
    #allocation3 [shape = 's32[2]{0}', space=sflag, size = 0x8, scoped, tag = 'scoped memory for tpu_custom_call.1']
    %7 = vsyncpa [#allocation3], 0
    %s8 = scalar_lea.sflag [#allocation3], 1
    %9 = vsyncpa %s8, 0
    loop: start=0, step=1, limit=4
    $region2: #{tpu_custom_call.1} parent=1 // loop_pre_header
      _
    $region3: #{tpu_custom_call.1} parent=1 // loop_header
      %s11 = sphi 0, %s15
      %p12 = scmp.ge.s32.totalorder %s11, 4
      %s21 = sphi 0, %s23
      %s24 = sphi 0, %s21
      %s25 = sphi 0, %s24
      %s41 = sphi 0, %s25
      %s45 = sphi 0, %s45
      %s47 = sphi 0, %s45
      %s48 = sphi 0, %s47
      %s62 = sphi 0, %s48
      %s68 = sphi 0, %s70
      %s71 = sphi 0, %s68
      %s72 = sphi 0, %s71
      %s88 = sphi 0, %s72
    $region4: #{tpu_custom_call.1} parent=1 // loop_header_branch
      %14 = sbr.rel (%p12) target = $region8
    $region5: #{tpu_custom_call.1} parent=1 // loop_body
      %s16 = ssub.s32 %s11, 1
      %s17 = ssub.s32 %s11, 2
      %s18 = sadd.s32 %s11, 1
      %s19 = ssub.s32 %s11, %s18
      %p20 = scmp.eq.s32.totalorder %s19, 0
      %s22 = sadd.s32 %s21, 1
      %s23 = scalar_select %p20, %s21, %s22
      %p26 = pneg %p20
      %p27 = scmp.eq.s32.totalorder %s11, 1
      %p28 = por %p26, %p27
      %p29 = scmp.ne.s32.totalorder %s21, %s24
      %p30 = scmp.eq.s32.totalorder %s11, 0
      %p31 = por %p29, %p30
      %p32 = scmp.ne.s32.totalorder %s21, %s24
      %p33 = scmp.eq.s32.totalorder %s16, 1
      %p34 = por %p32, %p33
      %p35 = scmp.ne.s32.totalorder %s24, %s25
      %p36 = scmp.eq.s32.totalorder %s16, 0
      %p37 = por %p35, %p36
      %p38 = scmp.ne.s32.totalorder %s24, %s25
      %p39 = scmp.eq.s32.totalorder %s17, 1
      %p40 = por %p38, %p39
      %p42 = scmp.ne.s32.totalorder %s25, %s41
      %p43 = scmp.eq.s32.totalorder %s17, 0
      %p44 = por %p42, %p43
      %s46 = sadd.s32 %s45, 1
      %p49 = scmp.eq.s32.totalorder %s11, 1
      %p50 = scmp.ne.s32.totalorder %s45, %s47
      %p51 = scmp.eq.s32.totalorder %s11, 0
      %p52 = por %p50, %p51
      %p53 = scmp.ne.s32.totalorder %s45, %s47
      %p54 = scmp.eq.s32.totalorder %s16, 1
      %p55 = por %p53, %p54
      %p56 = scmp.ne.s32.totalorder %s47, %s48
      %p57 = scmp.eq.s32.totalorder %s16, 0
      %p58 = por %p56, %p57
      %p59 = scmp.ne.s32.totalorder %s47, %s48
      %p60 = scmp.eq.s32.totalorder %s17, 1
      %p61 = por %p59, %p60
      %p63 = scmp.ne.s32.totalorder %s48, %s62
      %p64 = scmp.eq.s32.totalorder %s17, 0
      %p65 = por %p63, %p64
      %s66 = ssub.s32 %s11, %s18
      %p67 = scmp.eq.s32.totalorder %s66, 0
      %s69 = sadd.s32 %s68, 1
      %s70 = scalar_select %p67, %s68, %s69
      %p73 = pneg %p67
      %p74 = scmp.eq.s32.totalorder %s11, 1
      %p75 = por %p73, %p74
      %p76 = scmp.ne.s32.totalorder %s68, %s71
      %p77 = scmp.eq.s32.totalorder %s11, 0
      %p78 = por %p76, %p77
      %p79 = scmp.ne.s32.totalorder %s68, %s71
      %p80 = scmp.eq.s32.totalorder %s16, 1
      %p81 = por %p79, %p80
      %p82 = scmp.ne.s32.totalorder %s71, %s72
      %p83 = scmp.eq.s32.totalorder %s16, 0
      %p84 = por %p82, %p83
      %p85 = scmp.ne.s32.totalorder %s71, %s72
      %p86 = scmp.eq.s32.totalorder %s17, 1
      %p87 = por %p85, %p86
      %p89 = scmp.ne.s32.totalorder %s72, %s88
      %p90 = scmp.eq.s32.totalorder %s17, 0
      %p91 = por %p89, %p90
      %p92 = scmp.le.s32.totalorder 1, %s11
      %p93 = scmp.lt.s32.totalorder %s11, 3
      %p94 = pnand %p92, %p93
      %p95 = pneg %p94
      // Predicated region
      $region9: #{tpu_custom_call.1} parent=5 // pred_check
        _
      $region10: #{tpu_custom_call.1} parent=5 // pred_check_branch
        %97 = sbr.rel (%p94) target = $region12
      $region11: #{tpu_custom_call.1} parent=5 // pred_region
        %s98 = ssub.s32 %s11, 1
        // Predicated region
        $region13: #{tpu_custom_call.1} parent=11 // pred_check
          %p99 = pneg %p58
        $region14: #{tpu_custom_call.1} parent=11 // pred_check_branch
          %101 = sbr.rel (%p99) target = $region16
        $region15: #{tpu_custom_call.1} parent=11 // pred_region
          _
        $region16: #{tpu_custom_call.1} parent=11 // pred_fallthru
          _
      $region12: #{tpu_custom_call.1} parent=5 // pred_fallthru
        _
      %p102 = scmp.lt.s32.totalorder %s11, 2
      // Predicated region
      $region17: #{tpu_custom_call.1} parent=5 // pred_check
        %p103 = pneg %p102
      $region18: #{tpu_custom_call.1} parent=5 // pred_check_branch
        %105 = sbr.rel (%p103) target = $region20
      $region19: #{tpu_custom_call.1} parent=5 // pred_region
        // Predicated region
        $region21: #{tpu_custom_call.1} parent=19 // pred_check
          %p106 = pneg %p31
        $region22: #{tpu_custom_call.1} parent=19 // pred_check_branch
          %108 = sbr.rel (%p106) target = $region24
        $region23: #{tpu_custom_call.1} parent=19 // pred_region
          %s109 = smul.u32 32, %s11
          %s110 = ssub.s32 63, %s109
          %p111 = scmp.lt.s32.totalorder %s110, 32
          %s112 = scalar_select %p111, %s110, 32
          %s113 = smul.u32 128, %s112
          %p114 = scmp.lt.s32.totalorder %s109, 62
          %s115 = scalar_select %p114, %s109, 62
          %s116 = smul.addr %s115, 8
          %s117 = scalar_lea.vmem %s0, %s116
          %s118 = smul.u32 32, %s11
          %s119 = ssub.s32 63, %s118
          %p120 = scmp.lt.s32.totalorder %s119, 32
          %s121 = scalar_select %p120, %s119, 32
          %s122 = smul.u32 128, %s121
        $region24: #{tpu_custom_call.1} parent=19 // pred_fallthru
          _
      $region20: #{tpu_custom_call.1} parent=5 // pred_fallthru
        _
      %p123 = scmp.le.s32.totalorder 1, %s11
      %p124 = scmp.lt.s32.totalorder %s11, 3
      %p125 = pnand %p123, %p124
      %p126 = pneg %p125
      // Predicated region
      $region25: #{tpu_custom_call.1} parent=5 // pred_check
        _
      $region26: #{tpu_custom_call.1} parent=5 // pred_check_branch
        %128 = sbr.rel (%p125) target = $region28
      $region27: #{tpu_custom_call.1} parent=5 // pred_region
        %s129 = ssub.s32 %s11, 1
        %s130 = smul.u32 32, %s16
        %s131 = ssub.s32 63, %s130
        %p132 = scmp.lt.s32.totalorder %s131, 32
        %s133 = scalar_select %p132, %s131, 32
        %s134 = smul.u32 128, %s133
        %p135 = scmp.lt.s32.totalorder %s130, 62
        %s136 = scalar_select %p135, %s130, 62
        %s137 = smul.addr %s136, 8
        %s138 = scalar_lea.vmem %s0, %s137
        %p139 = pneg %p37
        %p140 = pneg %p34
        %p141 = pneg %p58
        %p142 = pneg %p55
        %p143 = pneg %p84
        %p144 = pneg %p81
        %s145 = sand.u32 %s71, 1
        %s146 = scalar_lea.sflag [#allocation3], %s145
        %s147 = sand.u32 %s71, 1
        %s148 = smul.addr %s147, 2
        %s149 = scalar_lea.vmem [#allocation2], %s148
        %s150 = smul.u32 32, %s16
        %s151 = ssub.s32 63, %s150
        %p152 = scmp.lt.s32.totalorder %s151, 32
        %s153 = scalar_select %p152, %s151, 32
        %s154 = smul.u32 128, %s153
        %p155 = scmp.lt.s32.totalorder %s150, 62
        %s156 = scalar_select %p155, %s150, 62
        %s157 = smul.addr %s156, 8
        %s158 = scalar_lea.vmem %s0, %s157
        %s159 = smul.u32 32, %s16
        %s160 = ssub.s32 63, %s159
        %p161 = scmp.lt.s32.totalorder %s160, 32
        %s162 = scalar_select %p161, %s160, 32
        %s163 = smul.u32 128, %s162
        %s164 = smul.u32 2, %s16
        %v165 = vld [vmem:[%s158] sm:$0xff]
        %v166 = vld [vmem:[%s158 + $0x8] sm:$0xff]
        %v167 = vld [vmem:[%s158 + $0x10] sm:$0xff]
        %v168 = vld [vmem:[%s158 + $0x18] sm:$0xff]
        %v169 = vld [vmem:[%s158 + $0x20] sm:$0xff]
        %v170 = vld [vmem:[%s158 + $0x28] sm:$0xff]
        %v171 = vld [vmem:[%s158 + $0x30] sm:$0xff]
        %v172 = vld [vmem:[%s158 + $0x38] sm:$0xff]
        %v173 = vld [vmem:[%s158 + $0x40] sm:$0xff]
        %v174 = vld [vmem:[%s158 + $0x48] sm:$0xff]
        %v175 = vld [vmem:[%s158 + $0x50] sm:$0xff]
        %v176 = vld [vmem:[%s158 + $0x58] sm:$0xff]
        %v177 = vld [vmem:[%s158 + $0x60] sm:$0xff]
        %v178 = vld [vmem:[%s158 + $0x68] sm:$0xff]
        %v179 = vld [vmem:[%s158 + $0x70] sm:$0xff]
        %v180 = vld [vmem:[%s158 + $0x78] sm:$0xff]
        %v181 = vld [vmem:[%s158 + $0x80] sm:$0xff]
        %v182 = vld [vmem:[%s158 + $0x88] sm:$0xff]
        %v183 = vld [vmem:[%s158 + $0x90] sm:$0xff]
        %v184 = vld [vmem:[%s158 + $0x98] sm:$0xff]
        %v185 = vld [vmem:[%s158 + $0xa0] sm:$0xff]
        %v186 = vld [vmem:[%s158 + $0xa8] sm:$0xff]
        %v187 = vld [vmem:[%s158 + $0xb0] sm:$0xff]
        %v188 = vld [vmem:[%s158 + $0xb8] sm:$0xff]
        %v189 = vld [vmem:[%s158 + $0xc0] sm:$0xff]
        %v190 = vld [vmem:[%s158 + $0xc8] sm:$0xff]
        %v191 = vld [vmem:[%s158 + $0xd0] sm:$0xff]
        %v192 = vld [vmem:[%s158 + $0xd8] sm:$0xff]
        %v193 = vld [vmem:[%s158 + $0xe0] sm:$0xff]
        %v194 = vld [vmem:[%s158 + $0xe8] sm:$0xff]
        %v195 = vld [vmem:[%s158 + $0xf0] sm:$0xff]
        %v196 = vld [vmem:[%s158 + $0xf8] sm:$0xff]
        %v197 = vlaneseq
        %v198 = vshrl.u32 %v197, 7
        %v199 = vadd.s32 %v198, 8
        %v200 = vadd.s32 %v198, 16
        %v201 = vadd.s32 %v198, 24
        %v202 = vadd.s32 %v198, 32
        %v203 = vlaneseq
        %v204 = vand.u32 %v203, 127
        %vm205 = vcmp.eq.s32.totalorder %v198, %v204
        %vm206 = vcmp.eq.s32.totalorder %v199, %v204
        %vm207 = vcmp.eq.s32.totalorder %v200, %v204
        %vm208 = vcmp.eq.s32.totalorder %v201, %v204
        %vm209 = vcmp.eq.s32.totalorder %v202, %v204
        %v210 = vsel %vm205, 1, 0
        %v211 = vsel %vm206, 1, 0
        %v212 = vsel %vm207, 1, 0
        %v213 = vsel %vm208, 1, 0
        %v214 = vsel %vm209, 1, 0
        %v215 = vcvt.s32.f32 %v210
        %v216 = vcvt.s32.f32 %v211
        %v217 = vcvt.s32.f32 %v212
        %v218 = vcvt.s32.f32 %v213
        %v219 = vcvt.s32.f32 %v214
        %vm220 = vcmask 269312
        %v222 = vsel %vm220, %v215, 0
        %v225 = vsel %vm220, %v216, 0
        %v228 = vsel %vm220, %v217, 0
        %v231 = vsel %vm220, %v218, 0
        %v234 = vsel %vm220, %v219, 0
        %v237 = vsel %vm220, %v165, 0
        %v240 = vsel %vm220, %v166, 0
        %v243 = vsel %vm220, %v167, 0
        %v246 = vsel %vm220, %v168, 0
        %v249 = vsel %vm220, %v169, 0
        %v252 = vsel %vm220, %v170, 0
        %v255 = vsel %vm220, %v171, 0
        %v258 = vsel %vm220, %v172, 0
        %v261 = vsel %vm220, %v173, 0
        %v264 = vsel %vm220, %v174, 0
        %v267 = vsel %vm220, %v175, 0
        %v270 = vsel %vm220, %v176, 0
        %v273 = vsel %vm220, %v177, 0
        %v276 = vsel %vm220, %v178, 0
        %v279 = vsel %vm220, %v179, 0
        %v282 = vsel %vm220, %v180, 0
        %v285 = vsel %vm220, %v181, 0
        %v288 = vsel %vm220, %v182, 0
        %v291 = vsel %vm220, %v183, 0
        %v294 = vsel %vm220, %v184, 0
        %v297 = vsel %vm220, %v185, 0
        %v300 = vsel %vm220, %v186, 0
        %v303 = vsel %vm220, %v187, 0
        %v306 = vsel %vm220, %v188, 0
        %v309 = vsel %vm220, %v189, 0
        %v312 = vsel %vm220, %v190, 0
        %v315 = vsel %vm220, %v191, 0
        %v318 = vsel %vm220, %v192, 0
        %v321 = vsel %vm220, %v193, 0
        %v324 = vsel %vm220, %v194, 0
        %v327 = vsel %vm220, %v195, 0
        %v330 = vsel %vm220, %v196, 0
        %332 = vmatprep.subr.mxu0 0.0
        %333 = vmatpush1.xpose.msra.mxu0 %v282
        %334 = vmatprep.subr.mxu0 0.0
        %335 = vmatpush1.xpose.msra.mxu0 %v279
        %336 = vmatprep.subr.mxu0 0.0
        %337 = vmatpush1.xpose.msra.mxu0 %v276
        %338 = vmatprep.subr.mxu0 0.0
        %339 = vmatpush1.xpose.msra.mxu0 %v273
        %340 = vmatprep.subr.mxu0 0.0
        %341 = vmatpush1.xpose.msra.mxu0 %v270
        %342 = vmatprep.subr.mxu0 0.0
        %343 = vmatpush1.xpose.msra.mxu0 %v267
        %344 = vmatprep.subr.mxu0 0.0
        %345 = vmatpush1.xpose.msra.mxu0 %v264
        %346 = vmatprep.subr.mxu0 0.0
        %347 = vmatpush1.xpose.msra.mxu0 %v261
        %348 = vmatprep.subr.mxu0 0.0
        %349 = vmatpush1.xpose.msra.mxu0 %v258
        %350 = vmatprep.subr.mxu0 0.0
        %351 = vmatpush1.xpose.msra.mxu0 %v255
        %352 = vmatprep.subr.mxu0 0.0
        %353 = vmatpush1.xpose.msra.mxu0 %v252
        %354 = vmatprep.subr.mxu0 0.0
        %355 = vmatpush1.xpose.msra.mxu0 %v249
        %356 = vmatprep.subr.mxu0 0.0
        %357 = vmatpush1.xpose.msra.mxu0 %v246
        %358 = vmatprep.subr.mxu0 0.0
        %359 = vmatpush1.xpose.msra.mxu0 %v243
        %360 = vmatprep.subr.mxu0 0.0
        %361 = vmatpush1.xpose.msra.mxu0 %v240
        %362 = vmatprep.subr.mxu0 0.0
        %363 = vmatpush1.xpose.msra.mxu0 %v237
        %364 = vmatprep.subr.mxu0 0.0
        %365 = vmatpush2.xpose.msra.mxu0 %v330
        %366 = vmatprep.subr.mxu0 0.0
        %367 = vmatpush2.xpose.msra.mxu0 %v327
        %368 = vmatprep.subr.mxu0 0.0
        %369 = vmatpush2.xpose.msra.mxu0 %v324
        %370 = vmatprep.subr.mxu0 0.0
        %371 = vmatpush2.xpose.msra.mxu0 %v321
        %372 = vmatprep.subr.mxu0 0.0
        %373 = vmatpush2.xpose.msra.mxu0 %v318
        %374 = vmatprep.subr.mxu0 0.0
        %375 = vmatpush2.xpose.msra.mxu0 %v315
        %376 = vmatprep.subr.mxu0 0.0
        %377 = vmatpush2.xpose.msra.mxu0 %v312
        %378 = vmatprep.subr.mxu0 0.0
        %379 = vmatpush2.xpose.msra.mxu0 %v309
        %380 = vmatprep.subr.mxu0 0.0
        %381 = vmatpush2.xpose.msra.mxu0 %v306
        %382 = vmatprep.subr.mxu0 0.0
        %383 = vmatpush2.xpose.msra.mxu0 %v303
        %384 = vmatprep.subr.mxu0 0.0
        %385 = vmatpush2.xpose.msra.mxu0 %v300
        %386 = vmatprep.subr.mxu0 0.0
        %387 = vmatpush2.xpose.msra.mxu0 %v297
        %388 = vmatprep.subr.mxu0 0.0
        %389 = vmatpush2.xpose.msra.mxu0 %v294
        %390 = vmatprep.subr.mxu0 0.0
        %391 = vmatpush2.xpose.msra.mxu0 %v291
        %392 = vmatprep.subr.mxu0 0.0
        %393 = vmatpush2.xpose.msra.mxu0 %v288
        %394 = vmatprep.subr.mxu0 0.0
        %395 = vmatpush2.xpose.msra.mxu0 %v285
        %396 = vmatprep.mubr.f32.mxu0 0.0
        %397 = vmatmul.mubr.f32.gmra.mxu0 %v222
        %v398 = vpop.f32.mrf.mxu0
        %v399 = vadd.f32 0.0, %v398
        %v400 = vpop.f32.mrf.mxu0
        %v401 = vadd.f32 0.0, %v400
        %402 = vmatprep.mubr.f32.mxu0 0.0
        %403 = vmatmul.mubr.f32.gmra.mxu0 %v225
        %v404 = vpop.f32.mrf.mxu0
        %v405 = vadd.f32 0.0, %v404
        %v406 = vpop.f32.mrf.mxu0
        %v407 = vadd.f32 0.0, %v406
        %408 = vmatprep.mubr.f32.mxu0 0.0
        %409 = vmatmul.mubr.f32.gmra.mxu0 %v228
        %v410 = vpop.f32.mrf.mxu0
        %v411 = vadd.f32 0.0, %v410
        %v412 = vpop.f32.mrf.mxu0
        %v413 = vadd.f32 0.0, %v412
        %414 = vmatprep.mubr.f32.mxu0 0.0
        %415 = vmatmul.mubr.f32.gmra.mxu0 %v231
        %v416 = vpop.f32.mrf.mxu0
        %v417 = vadd.f32 0.0, %v416
        %v418 = vpop.f32.mrf.mxu0
        %v419 = vadd.f32 0.0, %v418
        %420 = vmatprep.mubr.f32.mxu0 0.0
        %421 = vmatmul.mubr.f32.gmra.mxu0 %v234
        %v422 = vpop.f32.mrf.mxu0
        %v423 = vadd.f32 0.0, %v422
        %v424 = vpop.f32.mrf.mxu0
        %v425 = vadd.f32 0.0, %v424
        %426 = vdwg.mxu0
        %v427 = vmax.f32 %v399, 0.0
        %v428 = vmax.f32 %v401, 0.0
        %v429 = vmax.f32 %v405, 0.0
        %v430 = vmax.f32 %v407, 0.0
        %v431 = vmax.f32 %v411, 0.0
        %v432 = vmax.f32 %v413, 0.0
        %v433 = vmax.f32 %v417, 0.0
        %v434 = vmax.f32 %v419, 0.0
        %v435 = vmax.f32 %v423, 0.0
        %v436 = vmax.f32 %v425, 0.0
        %v437 = vrsqrt.pop %v427
        %v438 = vmul.f32 %v427, %v437
        %vm439 = vcmp.eq.f32.partialorder %v427, inf
        %v440 = vsel %vm439, %v427, %v438
        %vm441 = vcmp.eq.f32.partialorder %v427, 0.0
        %v442 = vand.u32 %v427, 2147483648
        %v443 = vsel %vm441, %v442, %v440
        %v444 = vrsqrt.pop %v428
        %v445 = vmul.f32 %v428, %v444
        %vm446 = vcmp.eq.f32.partialorder %v428, inf
        %v447 = vsel %vm446, %v428, %v445
        %vm448 = vcmp.eq.f32.partialorder %v428, 0.0
        %v449 = vand.u32 %v428, 2147483648
        %v450 = vsel %vm448, %v449, %v447
        %v451 = vrsqrt.pop %v429
        %v452 = vmul.f32 %v429, %v451
        %vm453 = vcmp.eq.f32.partialorder %v429, inf
        %v454 = vsel %vm453, %v429, %v452
        %vm455 = vcmp.eq.f32.partialorder %v429, 0.0
        %v456 = vand.u32 %v429, 2147483648
        %v457 = vsel %vm455, %v456, %v454
        %v458 = vrsqrt.pop %v430
        %v459 = vmul.f32 %v430, %v458
        %vm460 = vcmp.eq.f32.partialorder %v430, inf
        %v461 = vsel %vm460, %v430, %v459
        %vm462 = vcmp.eq.f32.partialorder %v430, 0.0
        %v463 = vand.u32 %v430, 2147483648
        %v464 = vsel %vm462, %v463, %v461
        %v465 = vrsqrt.pop %v431
        %v466 = vmul.f32 %v431, %v465
        %vm467 = vcmp.eq.f32.partialorder %v431, inf
        %v468 = vsel %vm467, %v431, %v466
        %vm469 = vcmp.eq.f32.partialorder %v431, 0.0
        %v470 = vand.u32 %v431, 2147483648
        %v471 = vsel %vm469, %v470, %v468
        %v472 = vrsqrt.pop %v432
        %v473 = vmul.f32 %v432, %v472
        %vm474 = vcmp.eq.f32.partialorder %v432, inf
        %v475 = vsel %vm474, %v432, %v473
        %vm476 = vcmp.eq.f32.partialorder %v432, 0.0
        %v477 = vand.u32 %v432, 2147483648
        %v478 = vsel %vm476, %v477, %v475
        %v479 = vrsqrt.pop %v433
        %v480 = vmul.f32 %v433, %v479
        %vm481 = vcmp.eq.f32.partialorder %v433, inf
        %v482 = vsel %vm481, %v433, %v480
        %vm483 = vcmp.eq.f32.partialorder %v433, 0.0
        %v484 = vand.u32 %v433, 2147483648
        %v485 = vsel %vm483, %v484, %v482
        %v486 = vrsqrt.pop %v434
        %v487 = vmul.f32 %v434, %v486
        %vm488 = vcmp.eq.f32.partialorder %v434, inf
        %v489 = vsel %vm488, %v434, %v487
        %vm490 = vcmp.eq.f32.partialorder %v434, 0.0
        %v491 = vand.u32 %v434, 2147483648
        %v492 = vsel %vm490, %v491, %v489
        %v493 = vrsqrt.pop %v435
        %v494 = vmul.f32 %v435, %v493
        %vm495 = vcmp.eq.f32.partialorder %v435, inf
        %v496 = vsel %vm495, %v435, %v494
        %vm497 = vcmp.eq.f32.partialorder %v435, 0.0
        %v498 = vand.u32 %v435, 2147483648
        %v499 = vsel %vm497, %v498, %v496
        %v500 = vrsqrt.pop %v436
        %v501 = vmul.f32 %v436, %v500
        %vm502 = vcmp.eq.f32.partialorder %v436, inf
        %v503 = vsel %vm502, %v436, %v501
        %vm504 = vcmp.eq.f32.partialorder %v436, 0.0
        %v505 = vand.u32 %v436, 2147483648
        %v506 = vsel %vm504, %v505, %v503
        %v507 = vadd.f32 %v443, 1e-10
        %v508 = vadd.f32 %v450, 1e-10
        %v509 = vadd.f32 %v457, 1e-10
        %v510 = vadd.f32 %v464, 1e-10
        %v511 = vadd.f32 %v471, 1e-10
        %v512 = vadd.f32 %v478, 1e-10
        %v513 = vadd.f32 %v485, 1e-10
        %v514 = vadd.f32 %v492, 1e-10
        %v515 = vadd.f32 %v499, 1e-10
        %v516 = vadd.f32 %v506, 1e-10
        %v517 = vlog2.pop %v507
        %v518 = vmul.f32 %v517, 0.6931472
        %v519 = vlog2.pop %v508
        %v520 = vmul.f32 %v519, 0.6931472
        %v521 = vlog2.pop %v509
        %v522 = vmul.f32 %v521, 0.6931472
        %v523 = vlog2.pop %v510
        %v524 = vmul.f32 %v523, 0.6931472
        %v525 = vlog2.pop %v511
        %v526 = vmul.f32 %v525, 0.6931472
        %v527 = vlog2.pop %v512
        %v528 = vmul.f32 %v527, 0.6931472
        %v529 = vlog2.pop %v513
        %v530 = vmul.f32 %v529, 0.6931472
        %v531 = vlog2.pop %v514
        %v532 = vmul.f32 %v531, 0.6931472
        %v533 = vlog2.pop %v515
        %v534 = vmul.f32 %v533, 0.6931472
        %v535 = vlog2.pop %v516
        %v536 = vmul.f32 %v535, 0.6931472
        %v537 = vmul.f32 %v518, 0.4342945
        %v538 = vmul.f32 %v520, 0.4342945
        %v539 = vmul.f32 %v522, 0.4342945
        %v540 = vmul.f32 %v524, 0.4342945
        %v541 = vmul.f32 %v526, 0.4342945
        %v542 = vmul.f32 %v528, 0.4342945
        %v543 = vmul.f32 %v530, 0.4342945
        %v544 = vmul.f32 %v532, 0.4342945
        %v545 = vmul.f32 %v534, 0.4342945
        %v546 = vmul.f32 %v536, 0.4342945
        %v547 = vld [vmem:[%s1] sm:$0xff]
        %v548 = vld [vmem:[%s1 + $0x8] sm:$0xff]
        %v549 = vld [vmem:[%s1 + $0x10] sm:$0xff]
        %v550 = vld [vmem:[%s1 + $0x18] sm:$0xff]
        %v551 = vld [vmem:[%s1 + $0x20] sm:$0x1]
        %553 = vset.pattern.permute.xlu0 0
        %554 = vperm.xlu0 %553, %v547
        %v555 = vpop.permute.xlu0 %554
        %558 = vset.pattern.permute.xlu0 0
        %559 = vperm.xlu0 %558, %v548
        %v560 = vpop.permute.xlu0 %559
        %563 = vset.pattern.permute.xlu0 0
        %564 = vperm.xlu0 %563, %v549
        %v565 = vpop.permute.xlu0 %564
        %568 = vset.pattern.permute.xlu0 0
        %569 = vperm.xlu0 %568, %v550
        %v570 = vpop.permute.xlu0 %569
        %573 = vset.pattern.permute.xlu0 0
        %574 = vperm.xlu0 %573, %v551
        %v575 = vpop.permute.xlu0 %574
        %v577 = vadd.f32 %v537, %v555
        %v578 = vadd.f32 %v538, %v555
        %v579 = vadd.f32 %v539, %v560
        %v580 = vadd.f32 %v540, %v560
        %v581 = vadd.f32 %v541, %v565
        %v582 = vadd.f32 %v542, %v565
        %v583 = vadd.f32 %v543, %v570
        %v584 = vadd.f32 %v544, %v570
        %v585 = vadd.f32 %v545, %v575
        %v586 = vadd.f32 %v546, %v575
        %v587 = vmax.f32 %v577, -80.0
        %v588 = vmax.f32 %v578, -80.0
        %v589 = vmax.f32 %v579, -80.0
        %v590 = vmax.f32 %v580, -80.0
        %v591 = vmax.f32 %v581, -80.0
        %v592 = vmax.f32 %v582, -80.0
        %v593 = vmax.f32 %v583, -80.0
        %v594 = vmax.f32 %v584, -80.0
        %v595 = vmax.f32 %v585, -80.0
        %v596 = vmax.f32 %v586, -80.0
        %v597 = vadd.f32 %v587, %v589
        %v598 = vadd.f32 %v597, %v591
        %v599 = vadd.f32 %v598, %v593
        %vm600 = vcmask 1040384
        %v601 = vsel %vm600, %v595, 0.0
        %v602 = vadd.f32 %v599, %v601
        %v603 = vrot.slane %v602, 4
        %v604 = vadd.f32 %v602, %v603
        %v605 = vrot.slane %v604, 2
        %v606 = vadd.f32 %v604, %v605
        %v607 = vrot.slane %v606, 1
        %v608 = vadd.f32 %v606, %v607
        %v609 = vadd.f32 %v588, %v590
        %v610 = vadd.f32 %v609, %v592
        %v611 = vadd.f32 %v610, %v594
        %v612 = vsel %vm600, %v596, 0.0
        %v613 = vadd.f32 %v611, %v612
        %v614 = vrot.slane %v613, 4
        %v615 = vadd.f32 %v613, %v614
        %v616 = vrot.slane %v615, 2
        %v617 = vadd.f32 %v615, %v616
        %v618 = vrot.slane %v617, 1
        %v619 = vadd.f32 %v617, %v618
        %v620 = vmul.f32 %v608, 0.030303031
        %v621 = vmul.f32 %v619, 0.030303031
        %v624 = vcombine.low %v620, %v621
        %v626 = vunpack.c.l.s4 1966171168
        %v627 = vunpack.c.0.s8 %v626
        %v628 = vlaneseq
        %v629 = vshrl.u32 %v628, 7
        %v630 = vsub.s32 %v627, %v629
        %v631 = vrot.slane %v624, %v630
        %v633 = vunpack.c.l.s4 1966171168
        %v634 = vunpack.c.0.s8 %v633
        %v635 = vlaneseq
        %v636 = vshrl.u32 %v635, 7
        %v637 = vsub.s32 %v634, %v636
        %v638 = vrot.slane %v631, %v637
        %v640 = vlaneseq
        %vm641 = vcmp.ge.s32.totalorder %v640, 0
        %vm642 = vcmp.lt.s32.totalorder %v640, 256
        %vm643 = vmand %vm641, %vm642
        %644 = vst.msk [vmem:[%s149] sm:$0x3] %vm643, %v638
        %s645 = sand.u32 %s71, 1
        %s646 = scalar_lea.sflag [#allocation3], %s645
        %s647 = sand.u32 %s71, 1
        %s648 = smul.addr %s647, 2
        %s649 = scalar_lea.vmem [#allocation2], %s648
        // Predicated region
        $region29: #{tpu_custom_call.1} parent=27 // pred_check
          %p650 = pneg %p81
        $region30: #{tpu_custom_call.1} parent=27 // pred_check_branch
          %652 = sbr.rel (%p650) target = $region32
        $region31: #{tpu_custom_call.1} parent=27 // pred_region
          %s653 = smul.u32 2, %s16
          %s655 = ssub.s32 32, 32
          %656 = vsyncadd %s646, %s655
          %s657 = smul.addr %s653, 16
          %s658 = scalar_lea.hbm %s2, %s657
          %s660 = sshll.u32 %s649, 4
          %s661 = int_to_ptr.vmem [resolvable:$true] %s660
          %663 = dma.vmem_to_hbm [thread:$0]  %s661, 32, %s658, %s646
        $region32: #{tpu_custom_call.1} parent=27 // pred_fallthru
          _
      $region28: #{tpu_custom_call.1} parent=5 // pred_fallthru
        _
      %p664 = scmp.le.s32.totalorder 2, %s11
      // Predicated region
      $region33: #{tpu_custom_call.1} parent=5 // pred_check
        %p665 = pneg %p664
      $region34: #{tpu_custom_call.1} parent=5 // pred_check_branch
        %667 = sbr.rel (%p665) target = $region36
      $region35: #{tpu_custom_call.1} parent=5 // pred_region
        %s668 = ssub.s32 %s11, 2
        // Predicated region
        $region37: #{tpu_custom_call.1} parent=35 // pred_check
          %p669 = pneg %p87
        $region38: #{tpu_custom_call.1} parent=35 // pred_check_branch
          %671 = sbr.rel (%p669) target = $region40
        $region39: #{tpu_custom_call.1} parent=35 // pred_region
          %s672 = sand.u32 %s72, 1
          %s673 = scalar_lea.sflag [#allocation3], %s672
          %s674 = sand.u32 %s72, 1
          %s675 = smul.addr %s674, 2
          %s676 = scalar_lea.vmem [#allocation2], %s675
          %677 = dma.done %s673, 32
        $region40: #{tpu_custom_call.1} parent=35 // pred_fallthru
          _
      $region36: #{tpu_custom_call.1} parent=5 // pred_fallthru
        _
    $region6: #{tpu_custom_call.1} parent=1 // loop_footer
      %s15 = sadd.s32 1, %s11
    $region7: #{tpu_custom_call.1} parent=1 // loop_footer_branch
      %10 = sbr.rel target = $region3
    $region8: #{tpu_custom_call.1} parent=1 // loop_exit
      _
    %678 = vsyncpa [#allocation3], 1
    %s679 = scalar_lea.sflag [#allocation3], 1
    %680 = vsyncpa %s679, 1

</llo_original>
